<compile_context>
chip_gen: v5e
topology: v5e:2x2
jax: 0.10.0
libtpu: 0.0.40
codegen_flags: <defaults>
</compile_context>

<pallas_src>
import functools

import jax
import jax.numpy as jnp
from jax.experimental import pallas as pl
from jax.experimental.pallas import tpu as pltpu


def _round_up(x, m):
    return -(-x // m) * m


def _pick_tile(n_pad, cap):
    """Largest power-of-two multiple of 128 that divides n_pad, capped at cap."""
    t = 128
    while t * 2 <= cap and n_pad % (t * 2) == 0:
        t *= 2
    return t


def _adj_kernel(xi_ref, xj_ref, njsq_ref, o_ref, *, bm, bn, inv_t):
    xi = xi_ref[...]                       # (bm, D_pad) rows of this tile
    xj = xj_ref[...]                       # (bn, D_pad) cols of this tile

    # Cross term on the MXU: (bm, bn) = xi @ xj^T (contract over features).
    g = jax.lax.dot_general(
        xi, xj, (((1,), (1,)), ((), ())),
        preferred_element_type=jnp.float32)

    ni = jnp.sum(xi * xi, axis=-1, keepdims=True)   # (bm, 1)
    nj = njsq_ref[...]                              # (1, bn), precomputed

    sq = jnp.maximum(ni + nj - 2.0 * g, 0.0)

    # The expansion is ill-conditioned at d == 0; force the true diagonal to
    # exactly zero distance so adj[i, i] == 1 like the reference.
    row0 = pl.program_id(0) * bm
    col0 = pl.program_id(1) * bn
    rows = row0 + jax.lax.broadcasted_iota(jnp.int32, (bm, bn), 0)
    cols = col0 + jax.lax.broadcasted_iota(jnp.int32, (bm, bn), 1)
    sq = jnp.where(rows == cols, 0.0, sq)

    dist = jnp.sqrt(sq)
    o_ref[...] = jnp.exp(dist * (-inv_t)).astype(o_ref.dtype)


@functools.partial(jax.jit, static_argnames=("t", "block_rows", "block_cols"))
def adj_forward(X, t=0.01, block_rows=256, block_cols=512):
    """Pallas implementation of Adj.forward: exp(-pairwise_l2(X) / t)."""
    N, D = X.shape
    X = X.astype(jnp.float32)

    N_pad = _round_up(N, 128)              # lane-dense output columns
    D_pad = _round_up(D, 128)              # lane-dense feature loads
    bm = _pick_tile(N_pad, block_rows)
    bn = _pick_tile(N_pad, block_cols)
    grid = (N_pad // bm, N_pad // bn)

    Xp = jnp.pad(X, ((0, N_pad - N), (0, D_pad - D)))       # zero pad: exact
    njsq = jnp.sum(Xp * Xp, axis=1)[None, :]                 # (1, N_pad)

    kernel = functools.partial(_adj_kernel, bm=bm, bn=bn, inv_t=1.0 / t)

    # Double-buffered tile footprint + headroom; capped below v7x's 64 MiB.
    vmem_need = 2 * 4 * (bm * D_pad + bn * D_pad + bn + bm * bn) + (2 << 20)
    vmem_limit = int(min(max(vmem_need, 32 << 20), 48 << 20))

    cost = pl.CostEstimate(
        flops=2 * N_pad * N_pad * D_pad + 6 * N_pad * N_pad,
        transcendentals=2 * N_pad * N_pad,            # sqrt + exp per element
        bytes_accessed=4 * (grid[1] * N_pad * D_pad   # row tiles (re-read per j)
                            + grid[0] * N_pad * D_pad  # col tiles (re-read per i)
                            + grid[0] * N_pad          # col norms
                            + N_pad * N_pad))          # output

    adj_pad = pl.pallas_call(
        kernel,
        out_shape=jax.ShapeDtypeStruct((N_pad, N_pad), jnp.float32),
        grid_spec=pltpu.PrefetchScalarGridSpec(
            num_scalar_prefetch=0,
            grid=grid,
            in_specs=[
                pl.BlockSpec((bm, D_pad), lambda i, j: (i, 0)),   # row tile
                pl.BlockSpec((bn, D_pad), lambda i, j: (j, 0)),   # col tile
                pl.BlockSpec((1, bn), lambda i, j: (0, j)),       # col norms
            ],
            out_specs=pl.BlockSpec((bm, bn), lambda i, j: (i, j)),
        ),
        compiler_params=pltpu.CompilerParams(
            dimension_semantics=("parallel", "parallel"),
            vmem_limit_bytes=vmem_limit),
        cost_estimate=cost,
    )(Xp, Xp, njsq)

    return adj_pad[:N, :N]


def _reference(X, t):
    diff = X[:, None, :] - X[None, :, :]
    dist = jnp.sqrt(jnp.sum(diff * diff, axis=-1))
    return jnp.exp(-dist / t)


if __name__ == "__main__":
    N, D = 8, 32
    key = jax.random.PRNGKey(0)
    X = jax.random.normal(key, (N, D), jnp.float32)

    # Module default temperature (t=0.01): diagonal 1, off-diagonal underflows.
    adj = jax.block_until_ready(adj_forward(X, t=0.01))
    assert adj.shape == (N, N)
    assert jnp.allclose(adj, _reference(X, 0.01), atol=1e-6, rtol=1e-3)

    # Softer temperature exercises non-trivial off-diagonal values.
    adj1 = jax.block_until_ready(adj_forward(X, t=1.0))
    assert jnp.allclose(adj1, _reference(X, 1.0), atol=1e-6, rtol=1e-3)

    print("KERNEL_OK")
</pallas_src>

<mosaic_0001>
module attributes {stable_mosaic.version = 11 : i64} {
  func.func @_adj_kernel(%arg0: i32, %arg1: i32, %arg2: memref<128x128xf32, #tpu.memory_space<vmem>>, %arg3: memref<128x128xf32, #tpu.memory_space<vmem>>, %arg4: memref<1x128xf32, #tpu.memory_space<vmem>>, %arg5: memref<128x128xf32, #tpu.memory_space<vmem>>) attributes {dimension_semantics = [#tpu.dimension_semantics<parallel>, #tpu.dimension_semantics<parallel>], iteration_bounds = array<i64: 1, 1>, scalar_prefetch = 0 : i64, scratch_operands = 0 : i64, tpu.core_type = #tpu.core_type<tc>, window_params = [{transform_indices = @transform_0, window_bounds = array<i64: 128, 128>}, {transform_indices = @transform_1, window_bounds = array<i64: 128, 128>}, {transform_indices = @transform_2, window_bounds = array<i64: 1, 128>}, {transform_indices = @transform_3, window_bounds = array<i64: 128, 128>}]} {
    %c0 = arith.constant 0 : index
    %c0_0 = arith.constant 0 : index
    %0 = vector.load %arg2[%c0, %c0_0] : memref<128x128xf32, #tpu.memory_space<vmem>>, vector<128x128xf32>
    %c0_1 = arith.constant 0 : index
    %c0_2 = arith.constant 0 : index
    %1 = vector.load %arg3[%c0_1, %c0_2] : memref<128x128xf32, #tpu.memory_space<vmem>>, vector<128x128xf32>
    %cst = arith.constant dense<0.000000e+00> : vector<128x128xf32>
    %2 = tpu.matmul %0, %1, %cst {dimension_numbers = #tpu.dot_dimension_numbers<[1], [1], [0], [0], [0, 0, 1, 0], [], []>} : vector<128x128xf32>, vector<128x128xf32>, vector<128x128xf32> -> vector<128x128xf32>
    %3 = arith.mulf %0, %0 : vector<128x128xf32>
    %cst_3 = arith.constant dense<0.000000e+00> : vector<128xf32>
    %4 = vector.multi_reduction <add>, %3, %cst_3 [1] : vector<128x128xf32> to vector<128xf32>
    %5 = vector.shape_cast %4 : vector<128xf32> to vector<128x1xf32>
    %c0_4 = arith.constant 0 : index
    %c0_5 = arith.constant 0 : index
    %6 = vector.load %arg4[%c0_4, %c0_5] : memref<1x128xf32, #tpu.memory_space<vmem>>, vector<1x128xf32>
    %7 = vector.broadcast %5 : vector<128x1xf32> to vector<128x128xf32>
    %8 = vector.broadcast %6 : vector<1x128xf32> to vector<128x128xf32>
    %9 = arith.addf %7, %8 : vector<128x128xf32>
    %cst_6 = arith.constant 2.000000e+00 : f32
    %10 = vector.broadcast %cst_6 : f32 to vector<128x128xf32>
    %11 = arith.mulf %10, %2 : vector<128x128xf32>
    %12 = arith.subf %9, %11 : vector<128x128xf32>
    %cst_7 = arith.constant 0.000000e+00 : f32
    %13 = vector.broadcast %cst_7 : f32 to vector<128x128xf32>
    %14 = arith.maximumf %12, %13 : vector<128x128xf32>
    %c128_i32 = arith.constant 128 : i32
    %15 = arith.muli %arg0, %c128_i32 : i32
    %c128_i32_8 = arith.constant 128 : i32
    %16 = arith.muli %arg1, %c128_i32_8 : i32
    %17 = tpu.iota {dimensions = array<i32: 0>} : vector<128x128xi32>
    %18 = vector.broadcast %15 : i32 to vector<128x128xi32>
    %19 = arith.addi %18, %17 : vector<128x128xi32>
    %20 = tpu.iota {dimensions = array<i32: 1>} : vector<128x128xi32>
    %21 = vector.broadcast %16 : i32 to vector<128x128xi32>
    %22 = arith.addi %21, %20 : vector<128x128xi32>
    %23 = arith.cmpi eq, %19, %22 : vector<128x128xi32>
    %cst_9 = arith.constant 0.000000e+00 : f32
    %24 = vector.broadcast %cst_9 : f32 to vector<128x128xf32>
    %25 = arith.select %23, %24, %14 : vector<128x128xi1>, vector<128x128xf32>
    %26 = math.sqrt %25 : vector<128x128xf32>
    %cst_10 = arith.constant -1.000000e+02 : f32
    %27 = vector.broadcast %cst_10 : f32 to vector<128x128xf32>
    %28 = arith.mulf %26, %27 : vector<128x128xf32>
    %29 = math.exp %28 : vector<128x128xf32>
    %c0_11 = arith.constant 0 : index
    %c0_12 = arith.constant 0 : index
    %30 = vector.load %arg5[%c0_11, %c0_12] : memref<128x128xf32, #tpu.memory_space<vmem>>, vector<128x128xf32>
    tpu.vector_store %arg5[%c0_11, %c0_12], %29 {strides = array<i32>} : memref<128x128xf32, #tpu.memory_space<vmem>>, vector<128x128xf32>,
    return
  }
  func.func @transform_0(%arg0: i32, %arg1: i32) -> (i32, i32) {
    %c0_i32 = arith.constant 0 : i32
    %c0_i32_0 = arith.constant 0 : i32
    return %arg0, %c0_i32 : i32, i32
  }
  func.func @transform_1(%arg0: i32, %arg1: i32) -> (i32, i32) {
    %c0_i32 = arith.constant 0 : i32
    %c0_i32_0 = arith.constant 0 : i32
    return %arg1, %c0_i32 : i32, i32
  }
  func.func @transform_2(%arg0: i32, %arg1: i32) -> (i32, i32) {
    %c0_i32 = arith.constant 0 : i32
    %c0_i32_0 = arith.constant 0 : i32
    return %c0_i32, %arg1 : i32, i32
  }
  func.func @transform_3(%arg0: i32, %arg1: i32) -> (i32, i32) {
    %c0_i32 = arith.constant 0 : i32
    return %arg0, %arg1 : i32, i32
  }
}

</mosaic_0001>

<llo_original>
// kernel: adj_forward.1
$region0: #{adj_forward.1}
  #allocation0 [shape = 'u32[]', space=smem, size = 0x4, offset = 0x4, fixed_abs, tag = 'smem constant byte address 0x4 - core index']
  #allocation1 [shape = 'u32[72,128]{1,0:T(1,128)}', space=vmem, size = 0x9000, scoped, tag = 'internal scratch']
  %s0 = inlined_call_operand.vmem [shape: f32[128,128], index: 0, kind: input, shape index: {}, may-alias: {0,1}]
  %s1 = inlined_call_operand.vmem [shape: f32[128,128], index: 1, kind: input, shape index: {}, may-alias: {0,1}]
  %s2 = inlined_call_operand.vmem [shape: f32[1,128], index: 2, kind: input, shape index: {}]
  %s3 = inlined_call_operand.vmem [shape: f32[128,128], index: 3, kind: output, shape index: {}]
  %s4 = sld [smem:[#allocation0]]
  $region22: #{adj_forward.1} parent=0
    _
  %s6 = ssub.s32 1, %s4
  %s7 = scalar_select 0, %s6, %s4
  // Predicated region
  $region2: #{adj_forward.1} parent=0 // pred_check
    _
  $region3: #{adj_forward.1} parent=0 // pred_check_branch
    %9 = sbr.rel (0) target = $region5
  $region4: #{adj_forward.1} parent=0 // pred_region
    _
  $region5: #{adj_forward.1} parent=0 // pred_fallthru
    _
  // Predicated region
  $region6: #{adj_forward.1} parent=0 // pred_check
    _
  $region7: #{adj_forward.1} parent=0 // pred_check_branch
    %11 = sbr.rel (0) target = $region9
  $region8: #{adj_forward.1} parent=0 // pred_region
    _
  $region9: #{adj_forward.1} parent=0 // pred_fallthru
    _
  // Predicated region
  $region10: #{adj_forward.1} parent=0 // pred_check
    _
  $region11: #{adj_forward.1} parent=0 // pred_check_branch
    %13 = sbr.rel (0) target = $region13
  $region12: #{adj_forward.1} parent=0 // pred_region
    _
  $region13: #{adj_forward.1} parent=0 // pred_fallthru
    _
  %v14 = vld [vmem:[%s0] sm:$0xff]
  %v15 = vld [vmem:[%s0 + $0x8] sm:$0xff]
  %v16 = vld [vmem:[%s0 + $0x10] sm:$0xff]
  %v17 = vld [vmem:[%s0 + $0x18] sm:$0xff]
  %v18 = vld [vmem:[%s0 + $0x20] sm:$0xff]
  %v19 = vld [vmem:[%s0 + $0x28] sm:$0xff]
  %v20 = vld [vmem:[%s0 + $0x30] sm:$0xff]
  %v21 = vld [vmem:[%s0 + $0x38] sm:$0xff]
  %v22 = vld [vmem:[%s0 + $0x40] sm:$0xff]
  %v23 = vld [vmem:[%s0 + $0x48] sm:$0xff]
  %v24 = vld [vmem:[%s0 + $0x50] sm:$0xff]
  %v25 = vld [vmem:[%s0 + $0x58] sm:$0xff]
  %v26 = vld [vmem:[%s0 + $0x60] sm:$0xff]
  %v27 = vld [vmem:[%s0 + $0x68] sm:$0xff]
  %v28 = vld [vmem:[%s0 + $0x70] sm:$0xff]
  %v29 = vld [vmem:[%s0 + $0x78] sm:$0xff]
  %v30 = vld [vmem:[%s1] sm:$0xff]
  %v31 = vld [vmem:[%s1 + $0x8] sm:$0xff]
  %v32 = vld [vmem:[%s1 + $0x10] sm:$0xff]
  %v33 = vld [vmem:[%s1 + $0x18] sm:$0xff]
  %v34 = vld [vmem:[%s1 + $0x20] sm:$0xff]
  %v35 = vld [vmem:[%s1 + $0x28] sm:$0xff]
  %v36 = vld [vmem:[%s1 + $0x30] sm:$0xff]
  %v37 = vld [vmem:[%s1 + $0x38] sm:$0xff]
  %v38 = vld [vmem:[%s1 + $0x40] sm:$0xff]
  %v39 = vld [vmem:[%s1 + $0x48] sm:$0xff]
  %v40 = vld [vmem:[%s1 + $0x50] sm:$0xff]
  %v41 = vld [vmem:[%s1 + $0x58] sm:$0xff]
  %v42 = vld [vmem:[%s1 + $0x60] sm:$0xff]
  %v43 = vld [vmem:[%s1 + $0x68] sm:$0xff]
  %v44 = vld [vmem:[%s1 + $0x70] sm:$0xff]
  %v45 = vld [vmem:[%s1 + $0x78] sm:$0xff]
  %46 = vmatpush.xpose.msra.mxu0 %v45
  %47 = vmatpush.xpose.msra.mxu0 %v44
  %48 = vmatpush.xpose.msra.mxu0 %v43
  %49 = vmatpush.xpose.msra.mxu0 %v42
  %50 = vmatpush.xpose.msra.mxu0 %v41
  %51 = vmatpush.xpose.msra.mxu0 %v40
  %52 = vmatpush.xpose.msra.mxu0 %v39
  %53 = vmatpush.xpose.msra.mxu0 %v38
  %54 = vmatpush.xpose.msra.mxu0 %v37
  %55 = vmatpush.xpose.msra.mxu0 %v36
  %56 = vmatpush.xpose.msra.mxu0 %v35
  %57 = vmatpush.xpose.msra.mxu0 %v34
  %58 = vmatpush.xpose.msra.mxu0 %v33
  %59 = vmatpush.xpose.msra.mxu0 %v32
  %60 = vmatpush.xpose.msra.mxu0 %v31
  %61 = vmatpush.xpose.msra.mxu0 %v30
  %62 = vmatmul.f32.gmra.mxu0 %v14
  %v63 = vpop.f32.mrf.mxu0
  %v64 = vadd.f32 0.0, %v63
  %65 = vmatmul.f32.gmra.mxu0 %v15
  %v66 = vpop.f32.mrf.mxu0
  %v67 = vadd.f32 0.0, %v66
  %68 = vmatmul.f32.gmra.mxu0 %v16
  %v69 = vpop.f32.mrf.mxu0
  %v70 = vadd.f32 0.0, %v69
  %71 = vmatmul.f32.gmra.mxu0 %v17
  %v72 = vpop.f32.mrf.mxu0
  %v73 = vadd.f32 0.0, %v72
  %74 = vmatmul.f32.gmra.mxu0 %v18
  %v75 = vpop.f32.mrf.mxu0
  %v76 = vadd.f32 0.0, %v75
  %77 = vmatmul.f32.gmra.mxu0 %v19
  %v78 = vpop.f32.mrf.mxu0
  %v79 = vadd.f32 0.0, %v78
  %80 = vmatmul.f32.gmra.mxu0 %v20
  %v81 = vpop.f32.mrf.mxu0
  %v82 = vadd.f32 0.0, %v81
  %83 = vmatmul.f32.gmra.mxu0 %v21
  %v84 = vpop.f32.mrf.mxu0
  %v85 = vadd.f32 0.0, %v84
  %86 = vmatmul.f32.gmra.mxu0 %v22
  %v87 = vpop.f32.mrf.mxu0
  %v88 = vadd.f32 0.0, %v87
  %89 = vmatmul.f32.gmra.mxu0 %v23
  %v90 = vpop.f32.mrf.mxu0
  %v91 = vadd.f32 0.0, %v90
  %92 = vmatmul.f32.gmra.mxu0 %v24
  %v93 = vpop.f32.mrf.mxu0
  %v94 = vadd.f32 0.0, %v93
  %95 = vmatmul.f32.gmra.mxu0 %v25
  %v96 = vpop.f32.mrf.mxu0
  %v97 = vadd.f32 0.0, %v96
  %98 = vmatmul.f32.gmra.mxu0 %v26
  %v99 = vpop.f32.mrf.mxu0
  %v100 = vadd.f32 0.0, %v99
  %101 = vmatmul.f32.gmra.mxu0 %v27
  %v102 = vpop.f32.mrf.mxu0
  %v103 = vadd.f32 0.0, %v102
  %104 = vmatmul.f32.gmra.mxu0 %v28
  %v105 = vpop.f32.mrf.mxu0
  %v106 = vadd.f32 0.0, %v105
  %107 = vmatmul.f32.gmra.mxu0 %v29
  %v108 = vpop.f32.mrf.mxu0
  %v109 = vadd.f32 0.0, %v108
  %110 = vdwg.mxu0
  %v111 = vmul.f32 %v14, %v14
  %v112 = vmul.f32 %v15, %v15
  %v113 = vmul.f32 %v16, %v16
  %v114 = vmul.f32 %v17, %v17
  %v115 = vmul.f32 %v18, %v18
  %v116 = vmul.f32 %v19, %v19
  %v117 = vmul.f32 %v20, %v20
  %v118 = vmul.f32 %v21, %v21
  %v119 = vmul.f32 %v22, %v22
  %v120 = vmul.f32 %v23, %v23
  %v121 = vmul.f32 %v24, %v24
  %v122 = vmul.f32 %v25, %v25
  %v123 = vmul.f32 %v26, %v26
  %v124 = vmul.f32 %v27, %v27
  %v125 = vmul.f32 %v28, %v28
  %v126 = vmul.f32 %v29, %v29
  %127 = vadd.xlane.f32.xlu0 %v111
  %v128 = vpop.xlane.xlu0 %127
  %129 = vadd.xlane.f32.xlu0 %v112
  %v130 = vpop.xlane.xlu0 %129
  %131 = vadd.xlane.f32.xlu0 %v113
  %v132 = vpop.xlane.xlu0 %131
  %133 = vadd.xlane.f32.xlu0 %v114
  %v134 = vpop.xlane.xlu0 %133
  %135 = vadd.xlane.f32.xlu0 %v115
  %v136 = vpop.xlane.xlu0 %135
  %137 = vadd.xlane.f32.xlu0 %v116
  %v138 = vpop.xlane.xlu0 %137
  %139 = vadd.xlane.f32.xlu0 %v117
  %v140 = vpop.xlane.xlu0 %139
  %141 = vadd.xlane.f32.xlu0 %v118
  %v142 = vpop.xlane.xlu0 %141
  %143 = vadd.xlane.f32.xlu0 %v119
  %v144 = vpop.xlane.xlu0 %143
  %145 = vadd.xlane.f32.xlu0 %v120
  %v146 = vpop.xlane.xlu0 %145
  %147 = vadd.xlane.f32.xlu0 %v121
  %v148 = vpop.xlane.xlu0 %147
  %149 = vadd.xlane.f32.xlu0 %v122
  %v150 = vpop.xlane.xlu0 %149
  %151 = vadd.xlane.f32.xlu0 %v123
  %v152 = vpop.xlane.xlu0 %151
  %153 = vadd.xlane.f32.xlu0 %v124
  %v154 = vpop.xlane.xlu0 %153
  %155 = vadd.xlane.f32.xlu0 %v125
  %v156 = vpop.xlane.xlu0 %155
  %157 = vadd.xlane.f32.xlu0 %v126
  %v158 = vpop.xlane.xlu0 %157
  %v159 = vld [vmem:[%s2] sm:$0x1]
  %v161 = vperm.slane %v159, 0
  %v163 = vadd.f32 %v128, %v161
  %v164 = vadd.f32 %v130, %v161
  %v165 = vadd.f32 %v132, %v161
  %v166 = vadd.f32 %v134, %v161
  %v167 = vadd.f32 %v136, %v161
  %v168 = vadd.f32 %v138, %v161
  %v169 = vadd.f32 %v140, %v161
  %v170 = vadd.f32 %v142, %v161
  %v171 = vadd.f32 %v144, %v161
  %v172 = vadd.f32 %v146, %v161
  %v173 = vadd.f32 %v148, %v161
  %v174 = vadd.f32 %v150, %v161
  %v175 = vadd.f32 %v152, %v161
  %v176 = vadd.f32 %v154, %v161
  %v177 = vadd.f32 %v156, %v161
  %v178 = vadd.f32 %v158, %v161
  %v179 = vmul.f32 %v64, 2.0
  %v180 = vmul.f32 %v67, 2.0
  %v181 = vmul.f32 %v70, 2.0
  %v182 = vmul.f32 %v73, 2.0
  %v183 = vmul.f32 %v76, 2.0
  %v184 = vmul.f32 %v79, 2.0
  %v185 = vmul.f32 %v82, 2.0
  %v186 = vmul.f32 %v85, 2.0
  %v187 = vmul.f32 %v88, 2.0
  %v188 = vmul.f32 %v91, 2.0
  %v189 = vmul.f32 %v94, 2.0
  %v190 = vmul.f32 %v97, 2.0
  %v191 = vmul.f32 %v100, 2.0
  %v192 = vmul.f32 %v103, 2.0
  %v193 = vmul.f32 %v106, 2.0
  %v194 = vmul.f32 %v109, 2.0
  %v195 = vsub.f32 %v163, %v179
  %v196 = vsub.f32 %v164, %v180
  %v197 = vsub.f32 %v165, %v181
  %v198 = vsub.f32 %v166, %v182
  %v199 = vsub.f32 %v167, %v183
  %v200 = vsub.f32 %v168, %v184
  %v201 = vsub.f32 %v169, %v185
  %v202 = vsub.f32 %v170, %v186
  %v203 = vsub.f32 %v171, %v187
  %v204 = vsub.f32 %v172, %v188
  %v205 = vsub.f32 %v173, %v189
  %v206 = vsub.f32 %v174, %v190
  %v207 = vsub.f32 %v175, %v191
  %v208 = vsub.f32 %v176, %v192
  %v209 = vsub.f32 %v177, %v193
  %v210 = vsub.f32 %v178, %v194
  %v211 = vmax.f32 %v195, 0.0
  %v212 = vmax.f32 %v196, 0.0
  %v213 = vmax.f32 %v197, 0.0
  %v214 = vmax.f32 %v198, 0.0
  %v215 = vmax.f32 %v199, 0.0
  %v216 = vmax.f32 %v200, 0.0
  %v217 = vmax.f32 %v201, 0.0
  %v218 = vmax.f32 %v202, 0.0
  %v219 = vmax.f32 %v203, 0.0
  %v220 = vmax.f32 %v204, 0.0
  %v221 = vmax.f32 %v205, 0.0
  %v222 = vmax.f32 %v206, 0.0
  %v223 = vmax.f32 %v207, 0.0
  %v224 = vmax.f32 %v208, 0.0
  %v225 = vmax.f32 %v209, 0.0
  %v226 = vmax.f32 %v210, 0.0
  %s227 = smul.u32 0, 128
  %s228 = smul.u32 0, 128
  %v229 = vlaneseq
  %v230 = vshrl.u32 %v229, 7
  %v231 = vadd.s32 %v230, 8
  %v232 = vadd.s32 %v230, 16
  %v233 = vadd.s32 %v230, 24
  %v234 = vadd.s32 %v230, 32
  %v235 = vadd.s32 %v230, 40
  %v236 = vadd.s32 %v230, 48
  %v237 = vadd.s32 %v230, 56
  %v238 = vadd.s32 %v230, 64
  %v239 = vadd.s32 %v230, 72
  %v240 = vadd.s32 %v230, 80
  %v241 = vadd.s32 %v230, 88
  %v242 = vadd.s32 %v230, 96
  %v243 = vadd.s32 %v230, 104
  %v244 = vadd.s32 %v230, 112
  %v245 = vadd.s32 %v230, 120
  %v246 = vstv %s227
  %v247 = vadd.s32 %v246, %v230
  %v248 = vadd.s32 %v246, %v231
  %v249 = vadd.s32 %v246, %v232
  %v250 = vadd.s32 %v246, %v233
  %v251 = vadd.s32 %v246, %v234
  %v252 = vadd.s32 %v246, %v235
  %v253 = vadd.s32 %v246, %v236
  %v254 = vadd.s32 %v246, %v237
  %v255 = vadd.s32 %v246, %v238
  %v256 = vadd.s32 %v246, %v239
  %v257 = vadd.s32 %v246, %v240
  %v258 = vadd.s32 %v246, %v241
  %v259 = vadd.s32 %v246, %v242
  %v260 = vadd.s32 %v246, %v243
  %v261 = vadd.s32 %v246, %v244
  %v262 = vadd.s32 %v246, %v245
  %v263 = vlaneseq
  %v264 = vand.u32 %v263, 127
  %v265 = vstv %s228
  %v266 = vadd.s32 %v265, %v264
  %vm267 = vcmp.eq.s32.totalorder %v247, %v266
  %vm268 = vcmp.eq.s32.totalorder %v248, %v266
  %vm269 = vcmp.eq.s32.totalorder %v249, %v266
  %vm270 = vcmp.eq.s32.totalorder %v250, %v266
  %vm271 = vcmp.eq.s32.totalorder %v251, %v266
  %vm272 = vcmp.eq.s32.totalorder %v252, %v266
  %vm273 = vcmp.eq.s32.totalorder %v253, %v266
  %vm274 = vcmp.eq.s32.totalorder %v254, %v266
  %vm275 = vcmp.eq.s32.totalorder %v255, %v266
  %vm276 = vcmp.eq.s32.totalorder %v256, %v266
  %vm277 = vcmp.eq.s32.totalorder %v257, %v266
  %vm278 = vcmp.eq.s32.totalorder %v258, %v266
  %vm279 = vcmp.eq.s32.totalorder %v259, %v266
  %vm280 = vcmp.eq.s32.totalorder %v260, %v266
  %vm281 = vcmp.eq.s32.totalorder %v261, %v266
  %vm282 = vcmp.eq.s32.totalorder %v262, %v266
  %v283 = vsel %vm267, 0.0, %v211
  %v284 = vsel %vm268, 0.0, %v212
  %v285 = vsel %vm269, 0.0, %v213
  %v286 = vsel %vm270, 0.0, %v214
  %v287 = vsel %vm271, 0.0, %v215
  %v288 = vsel %vm272, 0.0, %v216
  %v289 = vsel %vm273, 0.0, %v217
  %v290 = vsel %vm274, 0.0, %v218
  %v291 = vsel %vm275, 0.0, %v219
  %v292 = vsel %vm276, 0.0, %v220
  %v293 = vsel %vm277, 0.0, %v221
  %v294 = vsel %vm278, 0.0, %v222
  %v295 = vsel %vm279, 0.0, %v223
  %v296 = vsel %vm280, 0.0, %v224
  %v297 = vsel %vm281, 0.0, %v225
  %v298 = vsel %vm282, 0.0, %v226
  %v299 = vrsqrt.pop %v283
  %v300 = vmul.f32 %v299, %v283
  %v301 = vmul.f32 %v300, %v299
  %v302 = vmul.f32 0.5, %v301
  %v303 = vsub.f32 1.5, %v302
  %v304 = vmul.f32 %v299, %v303
  %v305 = vmul.f32 %v283, %v304
  %vm306 = vcmp.eq.f32.partialorder %v283, inf
  %v307 = vsel %vm306, %v283, %v305
  %vm308 = vcmp.eq.f32.partialorder %v283, 0.0
  %v309 = vand.u32 %v283, 2147483648
  %v310 = vsel %vm308, %v309, %v307
  %v311 = vrsqrt.pop %v284
  %v312 = vmul.f32 %v311, %v284
  %v313 = vmul.f32 %v312, %v311
  %v314 = vmul.f32 0.5, %v313
  %v315 = vsub.f32 1.5, %v314
  %v316 = vmul.f32 %v311, %v315
  %v317 = vmul.f32 %v284, %v316
  %vm318 = vcmp.eq.f32.partialorder %v284, inf
  %v319 = vsel %vm318, %v284, %v317
  %vm320 = vcmp.eq.f32.partialorder %v284, 0.0
  %v321 = vand.u32 %v284, 2147483648
  %v322 = vsel %vm320, %v321, %v319
  %v323 = vrsqrt.pop %v285
  %v324 = vmul.f32 %v323, %v285
  %v325 = vmul.f32 %v324, %v323
  %v326 = vmul.f32 0.5, %v325
  %v327 = vsub.f32 1.5, %v326
  %v328 = vmul.f32 %v323, %v327
  %v329 = vmul.f32 %v285, %v328
  %vm330 = vcmp.eq.f32.partialorder %v285, inf
  %v331 = vsel %vm330, %v285, %v329
  %vm332 = vcmp.eq.f32.partialorder %v285, 0.0
  %v333 = vand.u32 %v285, 2147483648
  %v334 = vsel %vm332, %v333, %v331
  %v335 = vrsqrt.pop %v286
  %v336 = vmul.f32 %v335, %v286
  %v337 = vmul.f32 %v336, %v335
  %v338 = vmul.f32 0.5, %v337
  %v339 = vsub.f32 1.5, %v338
  %v340 = vmul.f32 %v335, %v339
  %v341 = vmul.f32 %v286, %v340
  %vm342 = vcmp.eq.f32.partialorder %v286, inf
  %v343 = vsel %vm342, %v286, %v341
  %vm344 = vcmp.eq.f32.partialorder %v286, 0.0
  %v345 = vand.u32 %v286, 2147483648
  %v346 = vsel %vm344, %v345, %v343
  %v347 = vrsqrt.pop %v287
  %v348 = vmul.f32 %v347, %v287
  %v349 = vmul.f32 %v348, %v347
  %v350 = vmul.f32 0.5, %v349
  %v351 = vsub.f32 1.5, %v350
  %v352 = vmul.f32 %v347, %v351
  %v353 = vmul.f32 %v287, %v352
  %vm354 = vcmp.eq.f32.partialorder %v287, inf
  %v355 = vsel %vm354, %v287, %v353
  %vm356 = vcmp.eq.f32.partialorder %v287, 0.0
  %v357 = vand.u32 %v287, 2147483648
  %v358 = vsel %vm356, %v357, %v355
  %v359 = vrsqrt.pop %v288
  %v360 = vmul.f32 %v359, %v288
  %v361 = vmul.f32 %v360, %v359
  %v362 = vmul.f32 0.5, %v361
  %v363 = vsub.f32 1.5, %v362
  %v364 = vmul.f32 %v359, %v363
  %v365 = vmul.f32 %v288, %v364
  %vm366 = vcmp.eq.f32.partialorder %v288, inf
  %v367 = vsel %vm366, %v288, %v365
  %vm368 = vcmp.eq.f32.partialorder %v288, 0.0
  %v369 = vand.u32 %v288, 2147483648
  %v370 = vsel %vm368, %v369, %v367
  %v371 = vrsqrt.pop %v289
  %v372 = vmul.f32 %v371, %v289
  %v373 = vmul.f32 %v372, %v371
  %v374 = vmul.f32 0.5, %v373
  %v375 = vsub.f32 1.5, %v374
  %v376 = vmul.f32 %v371, %v375
  %v377 = vmul.f32 %v289, %v376
  %vm378 = vcmp.eq.f32.partialorder %v289, inf
  %v379 = vsel %vm378, %v289, %v377
  %vm380 = vcmp.eq.f32.partialorder %v289, 0.0
  %v381 = vand.u32 %v289, 2147483648
  %v382 = vsel %vm380, %v381, %v379
  %v383 = vrsqrt.pop %v290
  %v384 = vmul.f32 %v383, %v290
  %v385 = vmul.f32 %v384, %v383
  %v386 = vmul.f32 0.5, %v385
  %v387 = vsub.f32 1.5, %v386
  %v388 = vmul.f32 %v383, %v387
  %v389 = vmul.f32 %v290, %v388
  %vm390 = vcmp.eq.f32.partialorder %v290, inf
  %v391 = vsel %vm390, %v290, %v389
  %vm392 = vcmp.eq.f32.partialorder %v290, 0.0
  %v393 = vand.u32 %v290, 2147483648
  %v394 = vsel %vm392, %v393, %v391
  %v395 = vrsqrt.pop %v291
  %v396 = vmul.f32 %v395, %v291
  %v397 = vmul.f32 %v396, %v395
  %v398 = vmul.f32 0.5, %v397
  %v399 = vsub.f32 1.5, %v398
  %v400 = vmul.f32 %v395, %v399
  %v401 = vmul.f32 %v291, %v400
  %vm402 = vcmp.eq.f32.partialorder %v291, inf
  %v403 = vsel %vm402, %v291, %v401
  %vm404 = vcmp.eq.f32.partialorder %v291, 0.0
  %v405 = vand.u32 %v291, 2147483648
  %v406 = vsel %vm404, %v405, %v403
  %v407 = vrsqrt.pop %v292
  %v408 = vmul.f32 %v407, %v292
  %v409 = vmul.f32 %v408, %v407
  %v410 = vmul.f32 0.5, %v409
  %v411 = vsub.f32 1.5, %v410
  %v412 = vmul.f32 %v407, %v411
  %v413 = vmul.f32 %v292, %v412
  %vm414 = vcmp.eq.f32.partialorder %v292, inf
  %v415 = vsel %vm414, %v292, %v413
  %vm416 = vcmp.eq.f32.partialorder %v292, 0.0
  %v417 = vand.u32 %v292, 2147483648
  %v418 = vsel %vm416, %v417, %v415
  %v419 = vrsqrt.pop %v293
  %v420 = vmul.f32 %v419, %v293
  %v421 = vmul.f32 %v420, %v419
  %v422 = vmul.f32 0.5, %v421
  %v423 = vsub.f32 1.5, %v422
  %v424 = vmul.f32 %v419, %v423
  %v425 = vmul.f32 %v293, %v424
  %vm426 = vcmp.eq.f32.partialorder %v293, inf
  %v427 = vsel %vm426, %v293, %v425
  %vm428 = vcmp.eq.f32.partialorder %v293, 0.0
  %v429 = vand.u32 %v293, 2147483648
  %v430 = vsel %vm428, %v429, %v427
  %v431 = vrsqrt.pop %v294
  %v432 = vmul.f32 %v431, %v294
  %v433 = vmul.f32 %v432, %v431
  %v434 = vmul.f32 0.5, %v433
  %v435 = vsub.f32 1.5, %v434
  %v436 = vmul.f32 %v431, %v435
  %v437 = vmul.f32 %v294, %v436
  %vm438 = vcmp.eq.f32.partialorder %v294, inf
  %v439 = vsel %vm438, %v294, %v437
  %vm440 = vcmp.eq.f32.partialorder %v294, 0.0
  %v441 = vand.u32 %v294, 2147483648
  %v442 = vsel %vm440, %v441, %v439
  %v443 = vrsqrt.pop %v295
  %v444 = vmul.f32 %v443, %v295
  %v445 = vmul.f32 %v444, %v443
  %v446 = vmul.f32 0.5, %v445
  %v447 = vsub.f32 1.5, %v446
  %v448 = vmul.f32 %v443, %v447
  %v449 = vmul.f32 %v295, %v448
  %vm450 = vcmp.eq.f32.partialorder %v295, inf
  %v451 = vsel %vm450, %v295, %v449
  %vm452 = vcmp.eq.f32.partialorder %v295, 0.0
  %v453 = vand.u32 %v295, 2147483648
  %v454 = vsel %vm452, %v453, %v451
  %v455 = vrsqrt.pop %v296
  %v456 = vmul.f32 %v455, %v296
  %v457 = vmul.f32 %v456, %v455
  %v458 = vmul.f32 0.5, %v457
  %v459 = vsub.f32 1.5, %v458
  %v460 = vmul.f32 %v455, %v459
  %v461 = vmul.f32 %v296, %v460
  %vm462 = vcmp.eq.f32.partialorder %v296, inf
  %v463 = vsel %vm462, %v296, %v461
  %vm464 = vcmp.eq.f32.partialorder %v296, 0.0
  %v465 = vand.u32 %v296, 2147483648
  %v466 = vsel %vm464, %v465, %v463
  %v467 = vrsqrt.pop %v297
  %v468 = vmul.f32 %v467, %v297
  %v469 = vmul.f32 %v468, %v467
  %v470 = vmul.f32 0.5, %v469
  %v471 = vsub.f32 1.5, %v470
  %v472 = vmul.f32 %v467, %v471
  %v473 = vmul.f32 %v297, %v472
  %vm474 = vcmp.eq.f32.partialorder %v297, inf
  %v475 = vsel %vm474, %v297, %v473
  %vm476 = vcmp.eq.f32.partialorder %v297, 0.0
  %v477 = vand.u32 %v297, 2147483648
  %v478 = vsel %vm476, %v477, %v475
  %v479 = vrsqrt.pop %v298
  %v480 = vmul.f32 %v479, %v298
  %v481 = vmul.f32 %v480, %v479
  %v482 = vmul.f32 0.5, %v481
  %v483 = vsub.f32 1.5, %v482
  %v484 = vmul.f32 %v479, %v483
  %v485 = vmul.f32 %v298, %v484
  %vm486 = vcmp.eq.f32.partialorder %v298, inf
  %v487 = vsel %vm486, %v298, %v485
  %vm488 = vcmp.eq.f32.partialorder %v298, 0.0
  %v489 = vand.u32 %v298, 2147483648
  %v490 = vsel %vm488, %v489, %v487
  %v491 = vmul.f32 %v310, -100.0
  %v492 = vmul.f32 %v322, -100.0
  %v493 = vmul.f32 %v334, -100.0
  %v494 = vmul.f32 %v346, -100.0
  %v495 = vmul.f32 %v358, -100.0
  %v496 = vmul.f32 %v370, -100.0
  %v497 = vmul.f32 %v382, -100.0
  %v498 = vmul.f32 %v394, -100.0
  %v499 = vmul.f32 %v406, -100.0
  %v500 = vmul.f32 %v418, -100.0
  %v501 = vmul.f32 %v430, -100.0
  %v502 = vmul.f32 %v442, -100.0
  %v503 = vmul.f32 %v454, -100.0
  %v504 = vmul.f32 %v466, -100.0
  %v505 = vmul.f32 %v478, -100.0
  %v506 = vmul.f32 %v490, -100.0
  %v507 = vmul.f32 %v491, 1.442695
  %v508 = vpow.pop %v507
  %v509 = vmul.f32 %v492, 1.442695
  %v510 = vpow.pop %v509
  %v511 = vmul.f32 %v493, 1.442695
  %v512 = vpow.pop %v511
  %v513 = vmul.f32 %v494, 1.442695
  %v514 = vpow.pop %v513
  %v515 = vmul.f32 %v495, 1.442695
  %v516 = vpow.pop %v515
  %v517 = vmul.f32 %v496, 1.442695
  %v518 = vpow.pop %v517
  %v519 = vmul.f32 %v497, 1.442695
  %v520 = vpow.pop %v519
  %v521 = vmul.f32 %v498, 1.442695
  %v522 = vpow.pop %v521
  %v523 = vmul.f32 %v499, 1.442695
  %v524 = vpow.pop %v523
  %v525 = vmul.f32 %v500, 1.442695
  %v526 = vpow.pop %v525
  %v527 = vmul.f32 %v501, 1.442695
  %v528 = vpow.pop %v527
  %v529 = vmul.f32 %v502, 1.442695
  %v530 = vpow.pop %v529
  %v531 = vmul.f32 %v503, 1.442695
  %v532 = vpow.pop %v531
  %v533 = vmul.f32 %v504, 1.442695
  %v534 = vpow.pop %v533
  %v535 = vmul.f32 %v505, 1.442695
  %v536 = vpow.pop %v535
  %v537 = vmul.f32 %v506, 1.442695
  %v538 = vpow.pop %v537
  %539 = vst [vmem:[%s3] sm:$0xff] %v508
  %540 = vst [vmem:[%s3 + $0x8] sm:$0xff] %v510
  %541 = vst [vmem:[%s3 + $0x10] sm:$0xff] %v512
  %542 = vst [vmem:[%s3 + $0x18] sm:$0xff] %v514
  %543 = vst [vmem:[%s3 + $0x20] sm:$0xff] %v516
  %544 = vst [vmem:[%s3 + $0x28] sm:$0xff] %v518
  %545 = vst [vmem:[%s3 + $0x30] sm:$0xff] %v520
  %546 = vst [vmem:[%s3 + $0x38] sm:$0xff] %v522
  %547 = vst [vmem:[%s3 + $0x40] sm:$0xff] %v524
  %548 = vst [vmem:[%s3 + $0x48] sm:$0xff] %v526
  %549 = vst [vmem:[%s3 + $0x50] sm:$0xff] %v528
  %550 = vst [vmem:[%s3 + $0x58] sm:$0xff] %v530
  %551 = vst [vmem:[%s3 + $0x60] sm:$0xff] %v532
  %552 = vst [vmem:[%s3 + $0x68] sm:$0xff] %v534
  %553 = vst [vmem:[%s3 + $0x70] sm:$0xff] %v536
  %554 = vst [vmem:[%s3 + $0x78] sm:$0xff] %v538
  // Predicated region
  $region14: #{adj_forward.1} parent=0 // pred_check
    _
  $region15: #{adj_forward.1} parent=0 // pred_check_branch
    %556 = sbr.rel (0) target = $region17
  $region16: #{adj_forward.1} parent=0 // pred_region
    _
  $region17: #{adj_forward.1} parent=0 // pred_fallthru
    _
  // Predicated region
  $region18: #{adj_forward.1} parent=0 // pred_check
    _
  $region19: #{adj_forward.1} parent=0 // pred_check_branch
    %558 = sbr.rel (0) target = $region21
  $region20: #{adj_forward.1} parent=0 // pred_region
    _
  $region21: #{adj_forward.1} parent=0 // pred_fallthru
    _

</llo_original>
